<compile_context>
chip_gen: v5e
topology: v5e:2x2
jax: 0.10.0
libtpu: 0.0.40
codegen_flags: <defaults>
</compile_context>

<pallas_src>
import functools

import jax
import jax.numpy as jnp
from jax.experimental import pallas as pl
from jax.experimental.pallas import tpu as pltpu

LANE = 128        # TPU lane width (last dim of every block)
PSUM_ROWS = 64    # per-step partial-sum slab rows (add chain = tile_rows/64)
MIN_ROWS = 64     # below this (n < 8192 elems) plain XLA fusion wins


def _round_up(x, m):
    return ((x + m - 1) // m) * m


def _default_tile_rows():
    """Largest row tile that stays under the default scoped-VMEM limit."""
    try:
        kind = jax.devices()[0].device_kind.lower()
    except Exception:
        kind = ""
    # v6e / v7x: 4 slabs x 2 pipeline bufs x (4096*128*4 B) = 16 MiB < 32 MiB
    # scoped default.  v5e (and unknown/older): 2048 rows = 8 MiB, safe under
    # its 16 MiB scoped default.
    if "v6" in kind or "v7" in kind:
        return 4096
    return 2048


def _lt_kernel(l_ref, r_ref, value_ref, penalty_ref, psum_ref, *,
               norm, tile_rows, valid_rows):
    # Native-dtype streaming; upcast in-kernel (no wrapper-side HBM copy).
    l = l_ref[...]
    r = r_ref[...]
    if l.dtype != jnp.float32:
        l = l.astype(jnp.float32)
    if r.dtype != jnp.float32:
        r = r.astype(jnp.float32)

    v = l - r                                    # VPU
    p = jnp.maximum(v, jnp.float32(0.0))         # relu
    if norm == 2:
        p = p * p

    value_ref[...] = v.astype(value_ref.dtype)
    penalty_ref[...] = p.astype(penalty_ref.dtype)

    # Ragged tail: the last grid step may cover rows past the true row count.
    # Their value/penalty stores are masked by Pallas; zero them out of the
    # partial sum (jnp.where, not multiply, so garbage NaNs can't leak).
    if valid_rows is not None:
        row0 = pl.program_id(0) * tile_rows
        rid = row0 + jax.lax.broadcasted_iota(jnp.int32, p.shape, 0)
        p = jnp.where(rid < valid_rows, p, jnp.float32(0.0))

    # Two-stage reduce: (tile_rows,128) -> (PSUM_ROWS,128).  The reshape keeps
    # every (8,128) tile intact and the axis-0 sum is pure vreg adds with a
    # chain of only tile_rows // PSUM_ROWS links.
    psum_ref[...] = jnp.sum(p.reshape(-1, PSUM_ROWS, LANE), axis=0)


def lt_forward(left, right, norm=1, tile_rows=None):
    """Pallas implementation of LT.forward. Returns (loss, value, penalty)."""
    left = jnp.asarray(left)
    right = jnp.asarray(right)

    # PyTorch-style broadcasting + dtype promotion.
    out_shape = jnp.broadcast_shapes(left.shape, right.shape)
    dtype = jnp.promote_types(left.dtype, right.dtype)
    if not jnp.issubdtype(dtype, jnp.floating):
        dtype = jnp.float32
    left = jnp.broadcast_to(left.astype(dtype), out_shape)
    right = jnp.broadcast_to(right.astype(dtype), out_shape)

    n = 1
    for d in out_shape:
        n *= d
    rows = -(-n // LANE)

    # Tiny inputs: no pipelining to amortize -> plain XLA fusion is cheaper.
    if rows < MIN_ROWS:
        v = left - right
        p = jnp.maximum(v, jnp.zeros((), dtype))
        if norm == 2:
            p = p * p
        loss = (jnp.sum(p.astype(jnp.float32)) / jnp.float32(n)).astype(dtype)
        return loss, v, p

    if tile_rows is None:
        tile_rows = _default_tile_rows()
    tile_rows = max(PSUM_ROWS, (int(tile_rows) // PSUM_ROWS) * PSUM_ROWS)
    # Multiple of PSUM_ROWS, never larger than the array -> no tile-multiple
    # padding of inputs is ever needed; ragged last block is masked in-kernel.
    tr = min(tile_rows, (rows // PSUM_ROWS) * PSUM_ROWS)
    grid = -(-rows // tr)
    valid_rows = rows if rows % tr != 0 else None   # mask only when ragged

    # Only the (< 128-element) in-row tail ever gets zero-padded.
    n_lane = rows * LANE

    def _prep(x):
        x = x.reshape(-1)
        if n_lane != n:
            x = jnp.pad(x, (0, n_lane - n))   # zeros -> penalty contribution 0
        return x.reshape(rows, LANE)

    l2 = _prep(left)
    r2 = _prep(right)

    kernel = functools.partial(_lt_kernel, norm=norm, tile_rows=tr,
                               valid_rows=valid_rows)

    value2, penalty2, psums = pl.pallas_call(
        kernel,
        out_shape=(
            jax.ShapeDtypeStruct((rows, LANE), dtype),
            jax.ShapeDtypeStruct((rows, LANE), dtype),
            jax.ShapeDtypeStruct((grid * PSUM_ROWS, LANE), jnp.float32),
        ),
        grid_spec=pltpu.PrefetchScalarGridSpec(
            num_scalar_prefetch=0,
            grid=(grid,),
            in_specs=[
                pl.BlockSpec((tr, LANE), lambda i: (i, 0)),
                pl.BlockSpec((tr, LANE), lambda i: (i, 0)),
            ],
            out_specs=[
                pl.BlockSpec((tr, LANE), lambda i: (i, 0)),
                pl.BlockSpec((tr, LANE), lambda i: (i, 0)),
                pl.BlockSpec((PSUM_ROWS, LANE), lambda i: (i, 0)),
            ],
        ),
        compiler_params=pltpu.CompilerParams(
            # Every grid step writes disjoint output blocks -> fully parallel
            # (lets v7x shard the streaming across its 2 TensorCores).
            dimension_semantics=("parallel",),
        ),
    )(l2, r2)

    # Single cross-lane reduce + mean, once, outside the streaming loop.
    loss = (jnp.sum(psums) / jnp.float32(n)).astype(dtype)

    if n_lane == n:
        value = value2.reshape(out_shape)
        penalty = penalty2.reshape(out_shape)
    else:
        # TODO(synk): for element counts not a multiple of 128 the [:n] un-pad
        # slice copies the outputs once; unavoidable with lane-dense tiles.
        value = value2.reshape(-1)[:n].reshape(out_shape)
        penalty = penalty2.reshape(-1)[:n].reshape(out_shape)
    return loss, value, penalty


if __name__ == "__main__":
    key = jax.random.PRNGKey(0)
    ks = jax.random.split(key, 5)

    cases = [
        # (left_shape, right_shape, dtype)
        ((2, 4, 16, 16), (2, 4, 16, 16), jnp.float32),       # tiny -> XLA fallback
        ((2, 4, 64, 64), (2, 4, 64, 64), jnp.float32),       # aligned -> Pallas
        ((3, 5, 7, 11, 13), (3, 5, 7, 11, 13), jnp.float32),  # ragged -> mask + grid>1
        ((2, 4, 64, 64), (4, 64, 64), jnp.float32),          # broadcasting
        ((2, 4, 64, 64), (2, 4, 64, 64), jnp.bfloat16),      # native bf16 streaming
    ]

    for idx, (ls, rs, dt) in enumerate(cases):
        kl, kr = jax.random.split(ks[idx], 2)
        lhs = jax.random.normal(kl, ls, dtype=jnp.float32).astype(dt)
        rhs = jax.random.normal(kr, rs, dtype=jnp.float32).astype(dt)
        for norm in (1, 2):
            loss, value, penalty = lt_forward(lhs, rhs, norm=norm)
            jax.block_until_ready((loss, value, penalty))

            # reference (plain JAX in f32, then quantized like the kernel)
            l32 = lhs.astype(jnp.float32)
            r32 = rhs.astype(jnp.float32)
            v_ref = l32 - r32
            p_ref = jnp.maximum(v_ref, 0.0)
            if norm == 2:
                p_ref = p_ref ** 2
            loss_ref = jnp.mean(p_ref)

            full_shape = jnp.broadcast_shapes(ls, rs)
            assert value.shape == full_shape and penalty.shape == full_shape
            assert loss.shape == ()

            vr = v_ref.astype(dt).astype(jnp.float32)
            pr = p_ref.astype(dt).astype(jnp.float32)
            lr = loss_ref.astype(dt).astype(jnp.float32)
            atol = 1e-5 if dt == jnp.float32 else 1e-2
            assert jnp.allclose(value.astype(jnp.float32), vr, atol=atol)
            assert jnp.allclose(penalty.astype(jnp.float32), pr, atol=atol)
            assert jnp.allclose(loss.astype(jnp.float32), lr, atol=atol)

    print("KERNEL_OK")
</pallas_src>

<mosaic_0001>
module attributes {stable_mosaic.version = 11 : i64} {
  func.func @_lt_kernel(%arg0: i32, %arg1: memref<256x128xf32, #tpu.memory_space<vmem>>, %arg2: memref<256x128xf32, #tpu.memory_space<vmem>>, %arg3: memref<256x128xf32, #tpu.memory_space<vmem>>, %arg4: memref<256x128xf32, #tpu.memory_space<vmem>>, %arg5: memref<64x128xf32, #tpu.memory_space<vmem>>) attributes {dimension_semantics = [#tpu.dimension_semantics<parallel>], iteration_bounds = array<i64: 1>, scalar_prefetch = 0 : i64, scratch_operands = 0 : i64, tpu.core_type = #tpu.core_type<tc>, window_params = [{transform_indices = @transform_0, window_bounds = array<i64: 256, 128>}, {transform_indices = @transform_1, window_bounds = array<i64: 256, 128>}, {transform_indices = @transform_2, window_bounds = array<i64: 256, 128>}, {transform_indices = @transform_3, window_bounds = array<i64: 256, 128>}, {transform_indices = @transform_4, window_bounds = array<i64: 64, 128>}]} {
    %c0 = arith.constant 0 : index
    %c0_0 = arith.constant 0 : index
    %0 = vector.load %arg1[%c0, %c0_0] : memref<256x128xf32, #tpu.memory_space<vmem>>, vector<256x128xf32>
    %c0_1 = arith.constant 0 : index
    %c0_2 = arith.constant 0 : index
    %1 = vector.load %arg2[%c0_1, %c0_2] : memref<256x128xf32, #tpu.memory_space<vmem>>, vector<256x128xf32>
    %2 = arith.subf %0, %1 : vector<256x128xf32>
    %cst = arith.constant 0.000000e+00 : f32
    %3 = vector.broadcast %cst : f32 to vector<256x128xf32>
    %4 = arith.maximumf %2, %3 : vector<256x128xf32>
    %c0_3 = arith.constant 0 : index
    %c0_4 = arith.constant 0 : index
    %5 = vector.load %arg3[%c0_3, %c0_4] : memref<256x128xf32, #tpu.memory_space<vmem>>, vector<256x128xf32>
    tpu.vector_store %arg3[%c0_3, %c0_4], %2 {strides = array<i32>} : memref<256x128xf32, #tpu.memory_space<vmem>>, vector<256x128xf32>,
    %c0_5 = arith.constant 0 : index
    %c0_6 = arith.constant 0 : index
    %6 = vector.load %arg4[%c0_5, %c0_6] : memref<256x128xf32, #tpu.memory_space<vmem>>, vector<256x128xf32>
    tpu.vector_store %arg4[%c0_5, %c0_6], %4 {strides = array<i32>} : memref<256x128xf32, #tpu.memory_space<vmem>>, vector<256x128xf32>,
    %7 = vector.shape_cast %4 : vector<256x128xf32> to vector<4x64x128xf32>
    %cst_7 = arith.constant dense<0.000000e+00> : vector<64x128xf32>
    %8 = vector.multi_reduction <add>, %7, %cst_7 [0] : vector<4x64x128xf32> to vector<64x128xf32>
    %c0_8 = arith.constant 0 : index
    %c0_9 = arith.constant 0 : index
    %9 = vector.load %arg5[%c0_8, %c0_9] : memref<64x128xf32, #tpu.memory_space<vmem>>, vector<64x128xf32>
    tpu.vector_store %arg5[%c0_8, %c0_9], %8 {strides = array<i32>} : memref<64x128xf32, #tpu.memory_space<vmem>>, vector<64x128xf32>,
    return
  }
  func.func @transform_0(%arg0: i32) -> (i32, i32) {
    %c0_i32 = arith.constant 0 : i32
    %c0_i32_0 = arith.constant 0 : i32
    return %arg0, %c0_i32 : i32, i32
  }
  func.func @transform_1(%arg0: i32) -> (i32, i32) {
    %c0_i32 = arith.constant 0 : i32
    %c0_i32_0 = arith.constant 0 : i32
    return %arg0, %c0_i32 : i32, i32
  }
  func.func @transform_2(%arg0: i32) -> (i32, i32) {
    %c0_i32 = arith.constant 0 : i32
    %c0_i32_0 = arith.constant 0 : i32
    return %arg0, %c0_i32 : i32, i32
  }
  func.func @transform_3(%arg0: i32) -> (i32, i32) {
    %c0_i32 = arith.constant 0 : i32
    %c0_i32_0 = arith.constant 0 : i32
    return %arg0, %c0_i32 : i32, i32
  }
  func.func @transform_4(%arg0: i32) -> (i32, i32) {
    %c0_i32 = arith.constant 0 : i32
    %c0_i32_0 = arith.constant 0 : i32
    return %arg0, %c0_i32 : i32, i32
  }
}

</mosaic_0001>

<llo_original>
// kernel: tpu_custom_call.1
$region0: #{tpu_custom_call.1}
  #allocation0 [shape = 'u32[]', space=smem, size = 0x4, offset = 0x4, fixed_abs, tag = 'smem constant byte address 0x4 - core index']
  #allocation1 [shape = 'u32[72,128]{1,0:T(1,128)}', space=vmem, size = 0x9000, scoped, tag = 'internal scratch']
  %s0 = inlined_call_operand.hbm [shape: f32[256,128], index: 0, kind: input, shape index: {}]
  %s1 = inlined_call_operand.hbm [shape: f32[256,128], index: 1, kind: input, shape index: {}]
  %s2 = inlined_call_operand.hbm [shape: f32[256,128], index: 2, kind: output, shape index: {0}]
  %s3 = inlined_call_operand.hbm [shape: f32[256,128], index: 3, kind: output, shape index: {1}]
  %s4 = inlined_call_operand.hbm [shape: f32[64,128], index: 4, kind: output, shape index: {2}]
  %5 = xla_tuple %s2, %s3, %s4
  %s6 = sld [smem:[#allocation0]]
  $region42: #{tpu_custom_call.1} parent=0
    _
  %s8 = ssub.s32 1, %s6
  %s9 = scalar_select 0, %s8, %s6
  $region1: #{tpu_custom_call.1} parent=0
    #allocation2 [shape = 'u8[131072]{0}', space=vmem, size = 0x20000, scoped, tag = 'input window, operand 0, single buffered']
    #allocation3 [shape = 's32[1]{0}', space=sflag, size = 0x4, scoped, tag = 'scoped memory for tpu_custom_call.1']
    #allocation4 [shape = 's32[1]{0}', space=sflag, size = 0x4, scoped, tag = 'scoped memory for tpu_custom_call.1']
    #allocation5 [shape = 'u8[131072]{0}', space=vmem, size = 0x20000, scoped, tag = 'input window, operand 1, single buffered']
    #allocation6 [shape = 's32[1]{0}', space=sflag, size = 0x4, scoped, tag = 'scoped memory for tpu_custom_call.1']
    #allocation7 [shape = 'u8[131072]{0}', space=vmem, size = 0x20000, scoped, tag = 'output window, operand 0, single buffered']
    #allocation8 [shape = 'u8[131072]{0}', space=vmem, size = 0x20000, scoped, tag = 'output window, operand 1, single buffered']
    #allocation9 [shape = 's32[1]{0}', space=sflag, size = 0x4, scoped, tag = 'scoped memory for tpu_custom_call.1']
    #allocation10 [shape = 'u8[32768]{0}', space=vmem, size = 0x8000, scoped, tag = 'output window, operand 2, single buffered']
    %10 = vsyncpa [#allocation3], 0
    %11 = vsyncpa [#allocation6], 0
    %12 = vsyncpa [#allocation4], 0
    %13 = vsyncpa [#allocation9], 0
    // Predicated region
    $region2: #{tpu_custom_call.1} parent=1 // pred_check
      _
    $region3: #{tpu_custom_call.1} parent=1 // pred_check_branch
      %15 = sbr.rel (0) target = $region5
    $region4: #{tpu_custom_call.1} parent=1 // pred_region
      %17 = vsyncadd [#allocation3], 0
      %s18 = sshll.u32 %s0, 4
      %s19 = int_to_ptr.hbm [resolvable:$true] %s18
      %s20 = sshll.u32 [#allocation2], 4
      %s21 = int_to_ptr.vmem [resolvable:$true] %s20
      %26 = dma.hbm_to_vmem [thread:$0]  %s19, 4096, %s21, [#allocation3], 128, 128, 8
    $region5: #{tpu_custom_call.1} parent=1 // pred_fallthru
      _
    // Predicated region
    $region6: #{tpu_custom_call.1} parent=1 // pred_check
      _
    $region7: #{tpu_custom_call.1} parent=1 // pred_check_branch
      %28 = sbr.rel (0) target = $region9
    $region8: #{tpu_custom_call.1} parent=1 // pred_region
      %30 = vsyncadd [#allocation6], 0
      %s31 = sshll.u32 %s1, 4
      %s32 = int_to_ptr.hbm [resolvable:$true] %s31
      %s33 = sshll.u32 [#allocation5], 4
      %s34 = int_to_ptr.vmem [resolvable:$true] %s33
      %39 = dma.hbm_to_vmem [thread:$0]  %s32, 4096, %s34, [#allocation6], 128, 128, 8
    $region9: #{tpu_custom_call.1} parent=1 // pred_fallthru
      _
    // Predicated region
    $region10: #{tpu_custom_call.1} parent=1 // pred_check
      _
    $region11: #{tpu_custom_call.1} parent=1 // pred_check_branch
      %41 = sbr.rel (0) target = $region13
    $region12: #{tpu_custom_call.1} parent=1 // pred_region
      %43 = dma.done [#allocation3], 4096
    $region13: #{tpu_custom_call.1} parent=1 // pred_fallthru
      _
    // Predicated region
    $region14: #{tpu_custom_call.1} parent=1 // pred_check
      _
    $region15: #{tpu_custom_call.1} parent=1 // pred_check_branch
      %45 = sbr.rel (0) target = $region17
    $region16: #{tpu_custom_call.1} parent=1 // pred_region
      %47 = dma.done [#allocation6], 4096
    $region17: #{tpu_custom_call.1} parent=1 // pred_fallthru
      _
    %v48 = vld [vmem:[#allocation2] sm:$0xff]
    %v49 = vld [vmem:[#allocation2 + $0x8] sm:$0xff]
    %v50 = vld [vmem:[#allocation2 + $0x10] sm:$0xff]
    %v51 = vld [vmem:[#allocation2 + $0x18] sm:$0xff]
    %v52 = vld [vmem:[#allocation2 + $0x20] sm:$0xff]
    %v53 = vld [vmem:[#allocation2 + $0x28] sm:$0xff]
    %v54 = vld [vmem:[#allocation2 + $0x30] sm:$0xff]
    %v55 = vld [vmem:[#allocation2 + $0x38] sm:$0xff]
    %v56 = vld [vmem:[#allocation2 + $0x40] sm:$0xff]
    %v57 = vld [vmem:[#allocation2 + $0x48] sm:$0xff]
    %v58 = vld [vmem:[#allocation2 + $0x50] sm:$0xff]
    %v59 = vld [vmem:[#allocation2 + $0x58] sm:$0xff]
    %v60 = vld [vmem:[#allocation2 + $0x60] sm:$0xff]
    %v61 = vld [vmem:[#allocation2 + $0x68] sm:$0xff]
    %v62 = vld [vmem:[#allocation2 + $0x70] sm:$0xff]
    %v63 = vld [vmem:[#allocation2 + $0x78] sm:$0xff]
    %v64 = vld [vmem:[#allocation2 + $0x80] sm:$0xff]
    %v65 = vld [vmem:[#allocation2 + $0x88] sm:$0xff]
    %v66 = vld [vmem:[#allocation2 + $0x90] sm:$0xff]
    %v67 = vld [vmem:[#allocation2 + $0x98] sm:$0xff]
    %v68 = vld [vmem:[#allocation2 + $0xa0] sm:$0xff]
    %v69 = vld [vmem:[#allocation2 + $0xa8] sm:$0xff]
    %v70 = vld [vmem:[#allocation2 + $0xb0] sm:$0xff]
    %v71 = vld [vmem:[#allocation2 + $0xb8] sm:$0xff]
    %v72 = vld [vmem:[#allocation2 + $0xc0] sm:$0xff]
    %v73 = vld [vmem:[#allocation2 + $0xc8] sm:$0xff]
    %v74 = vld [vmem:[#allocation2 + $0xd0] sm:$0xff]
    %v75 = vld [vmem:[#allocation2 + $0xd8] sm:$0xff]
    %v76 = vld [vmem:[#allocation2 + $0xe0] sm:$0xff]
    %v77 = vld [vmem:[#allocation2 + $0xe8] sm:$0xff]
    %v78 = vld [vmem:[#allocation2 + $0xf0] sm:$0xff]
    %v79 = vld [vmem:[#allocation2 + $0xf8] sm:$0xff]
    %v80 = vld [vmem:[#allocation5] sm:$0xff]
    %v81 = vld [vmem:[#allocation5 + $0x8] sm:$0xff]
    %v82 = vld [vmem:[#allocation5 + $0x10] sm:$0xff]
    %v83 = vld [vmem:[#allocation5 + $0x18] sm:$0xff]
    %v84 = vld [vmem:[#allocation5 + $0x20] sm:$0xff]
    %v85 = vld [vmem:[#allocation5 + $0x28] sm:$0xff]
    %v86 = vld [vmem:[#allocation5 + $0x30] sm:$0xff]
    %v87 = vld [vmem:[#allocation5 + $0x38] sm:$0xff]
    %v88 = vld [vmem:[#allocation5 + $0x40] sm:$0xff]
    %v89 = vld [vmem:[#allocation5 + $0x48] sm:$0xff]
    %v90 = vld [vmem:[#allocation5 + $0x50] sm:$0xff]
    %v91 = vld [vmem:[#allocation5 + $0x58] sm:$0xff]
    %v92 = vld [vmem:[#allocation5 + $0x60] sm:$0xff]
    %v93 = vld [vmem:[#allocation5 + $0x68] sm:$0xff]
    %v94 = vld [vmem:[#allocation5 + $0x70] sm:$0xff]
    %v95 = vld [vmem:[#allocation5 + $0x78] sm:$0xff]
    %v96 = vld [vmem:[#allocation5 + $0x80] sm:$0xff]
    %v97 = vld [vmem:[#allocation5 + $0x88] sm:$0xff]
    %v98 = vld [vmem:[#allocation5 + $0x90] sm:$0xff]
    %v99 = vld [vmem:[#allocation5 + $0x98] sm:$0xff]
    %v100 = vld [vmem:[#allocation5 + $0xa0] sm:$0xff]
    %v101 = vld [vmem:[#allocation5 + $0xa8] sm:$0xff]
    %v102 = vld [vmem:[#allocation5 + $0xb0] sm:$0xff]
    %v103 = vld [vmem:[#allocation5 + $0xb8] sm:$0xff]
    %v104 = vld [vmem:[#allocation5 + $0xc0] sm:$0xff]
    %v105 = vld [vmem:[#allocation5 + $0xc8] sm:$0xff]
    %v106 = vld [vmem:[#allocation5 + $0xd0] sm:$0xff]
    %v107 = vld [vmem:[#allocation5 + $0xd8] sm:$0xff]
    %v108 = vld [vmem:[#allocation5 + $0xe0] sm:$0xff]
    %v109 = vld [vmem:[#allocation5 + $0xe8] sm:$0xff]
    %v110 = vld [vmem:[#allocation5 + $0xf0] sm:$0xff]
    %v111 = vld [vmem:[#allocation5 + $0xf8] sm:$0xff]
    %v112 = vsub.f32 %v48, %v80
    %v113 = vsub.f32 %v49, %v81
    %v114 = vsub.f32 %v50, %v82
    %v115 = vsub.f32 %v51, %v83
    %v116 = vsub.f32 %v52, %v84
    %v117 = vsub.f32 %v53, %v85
    %v118 = vsub.f32 %v54, %v86
    %v119 = vsub.f32 %v55, %v87
    %v120 = vsub.f32 %v56, %v88
    %v121 = vsub.f32 %v57, %v89
    %v122 = vsub.f32 %v58, %v90
    %v123 = vsub.f32 %v59, %v91
    %v124 = vsub.f32 %v60, %v92
    %v125 = vsub.f32 %v61, %v93
    %v126 = vsub.f32 %v62, %v94
    %v127 = vsub.f32 %v63, %v95
    %v128 = vsub.f32 %v64, %v96
    %v129 = vsub.f32 %v65, %v97
    %v130 = vsub.f32 %v66, %v98
    %v131 = vsub.f32 %v67, %v99
    %v132 = vsub.f32 %v68, %v100
    %v133 = vsub.f32 %v69, %v101
    %v134 = vsub.f32 %v70, %v102
    %v135 = vsub.f32 %v71, %v103
    %v136 = vsub.f32 %v72, %v104
    %v137 = vsub.f32 %v73, %v105
    %v138 = vsub.f32 %v74, %v106
    %v139 = vsub.f32 %v75, %v107
    %v140 = vsub.f32 %v76, %v108
    %v141 = vsub.f32 %v77, %v109
    %v142 = vsub.f32 %v78, %v110
    %v143 = vsub.f32 %v79, %v111
    %v144 = vmax.f32 %v112, 0.0
    %v145 = vmax.f32 %v113, 0.0
    %v146 = vmax.f32 %v114, 0.0
    %v147 = vmax.f32 %v115, 0.0
    %v148 = vmax.f32 %v116, 0.0
    %v149 = vmax.f32 %v117, 0.0
    %v150 = vmax.f32 %v118, 0.0
    %v151 = vmax.f32 %v119, 0.0
    %v152 = vmax.f32 %v120, 0.0
    %v153 = vmax.f32 %v121, 0.0
    %v154 = vmax.f32 %v122, 0.0
    %v155 = vmax.f32 %v123, 0.0
    %v156 = vmax.f32 %v124, 0.0
    %v157 = vmax.f32 %v125, 0.0
    %v158 = vmax.f32 %v126, 0.0
    %v159 = vmax.f32 %v127, 0.0
    %v160 = vmax.f32 %v128, 0.0
    %v161 = vmax.f32 %v129, 0.0
    %v162 = vmax.f32 %v130, 0.0
    %v163 = vmax.f32 %v131, 0.0
    %v164 = vmax.f32 %v132, 0.0
    %v165 = vmax.f32 %v133, 0.0
    %v166 = vmax.f32 %v134, 0.0
    %v167 = vmax.f32 %v135, 0.0
    %v168 = vmax.f32 %v136, 0.0
    %v169 = vmax.f32 %v137, 0.0
    %v170 = vmax.f32 %v138, 0.0
    %v171 = vmax.f32 %v139, 0.0
    %v172 = vmax.f32 %v140, 0.0
    %v173 = vmax.f32 %v141, 0.0
    %v174 = vmax.f32 %v142, 0.0
    %v175 = vmax.f32 %v143, 0.0
    %176 = vst [vmem:[#allocation7] sm:$0xff] %v112
    %177 = vst [vmem:[#allocation7 + $0x8] sm:$0xff] %v113
    %178 = vst [vmem:[#allocation7 + $0x10] sm:$0xff] %v114
    %179 = vst [vmem:[#allocation7 + $0x18] sm:$0xff] %v115
    %180 = vst [vmem:[#allocation7 + $0x20] sm:$0xff] %v116
    %181 = vst [vmem:[#allocation7 + $0x28] sm:$0xff] %v117
    %182 = vst [vmem:[#allocation7 + $0x30] sm:$0xff] %v118
    %183 = vst [vmem:[#allocation7 + $0x38] sm:$0xff] %v119
    %184 = vst [vmem:[#allocation7 + $0x40] sm:$0xff] %v120
    %185 = vst [vmem:[#allocation7 + $0x48] sm:$0xff] %v121
    %186 = vst [vmem:[#allocation7 + $0x50] sm:$0xff] %v122
    %187 = vst [vmem:[#allocation7 + $0x58] sm:$0xff] %v123
    %188 = vst [vmem:[#allocation7 + $0x60] sm:$0xff] %v124
    %189 = vst [vmem:[#allocation7 + $0x68] sm:$0xff] %v125
    %190 = vst [vmem:[#allocation7 + $0x70] sm:$0xff] %v126
    %191 = vst [vmem:[#allocation7 + $0x78] sm:$0xff] %v127
    %192 = vst [vmem:[#allocation7 + $0x80] sm:$0xff] %v128
    %193 = vst [vmem:[#allocation7 + $0x88] sm:$0xff] %v129
    %194 = vst [vmem:[#allocation7 + $0x90] sm:$0xff] %v130
    %195 = vst [vmem:[#allocation7 + $0x98] sm:$0xff] %v131
    %196 = vst [vmem:[#allocation7 + $0xa0] sm:$0xff] %v132
    %197 = vst [vmem:[#allocation7 + $0xa8] sm:$0xff] %v133
    %198 = vst [vmem:[#allocation7 + $0xb0] sm:$0xff] %v134
    %199 = vst [vmem:[#allocation7 + $0xb8] sm:$0xff] %v135
    %200 = vst [vmem:[#allocation7 + $0xc0] sm:$0xff] %v136
    %201 = vst [vmem:[#allocation7 + $0xc8] sm:$0xff] %v137
    %202 = vst [vmem:[#allocation7 + $0xd0] sm:$0xff] %v138
    %203 = vst [vmem:[#allocation7 + $0xd8] sm:$0xff] %v139
    %204 = vst [vmem:[#allocation7 + $0xe0] sm:$0xff] %v140
    %205 = vst [vmem:[#allocation7 + $0xe8] sm:$0xff] %v141
    %206 = vst [vmem:[#allocation7 + $0xf0] sm:$0xff] %v142
    %207 = vst [vmem:[#allocation7 + $0xf8] sm:$0xff] %v143
    %208 = vst [vmem:[#allocation8] sm:$0xff] %v144
    %209 = vst [vmem:[#allocation8 + $0x8] sm:$0xff] %v145
    %210 = vst [vmem:[#allocation8 + $0x10] sm:$0xff] %v146
    %211 = vst [vmem:[#allocation8 + $0x18] sm:$0xff] %v147
    %212 = vst [vmem:[#allocation8 + $0x20] sm:$0xff] %v148
    %213 = vst [vmem:[#allocation8 + $0x28] sm:$0xff] %v149
    %214 = vst [vmem:[#allocation8 + $0x30] sm:$0xff] %v150
    %215 = vst [vmem:[#allocation8 + $0x38] sm:$0xff] %v151
    %216 = vst [vmem:[#allocation8 + $0x40] sm:$0xff] %v152
    %217 = vst [vmem:[#allocation8 + $0x48] sm:$0xff] %v153
    %218 = vst [vmem:[#allocation8 + $0x50] sm:$0xff] %v154
    %219 = vst [vmem:[#allocation8 + $0x58] sm:$0xff] %v155
    %220 = vst [vmem:[#allocation8 + $0x60] sm:$0xff] %v156
    %221 = vst [vmem:[#allocation8 + $0x68] sm:$0xff] %v157
    %222 = vst [vmem:[#allocation8 + $0x70] sm:$0xff] %v158
    %223 = vst [vmem:[#allocation8 + $0x78] sm:$0xff] %v159
    %224 = vst [vmem:[#allocation8 + $0x80] sm:$0xff] %v160
    %225 = vst [vmem:[#allocation8 + $0x88] sm:$0xff] %v161
    %226 = vst [vmem:[#allocation8 + $0x90] sm:$0xff] %v162
    %227 = vst [vmem:[#allocation8 + $0x98] sm:$0xff] %v163
    %228 = vst [vmem:[#allocation8 + $0xa0] sm:$0xff] %v164
    %229 = vst [vmem:[#allocation8 + $0xa8] sm:$0xff] %v165
    %230 = vst [vmem:[#allocation8 + $0xb0] sm:$0xff] %v166
    %231 = vst [vmem:[#allocation8 + $0xb8] sm:$0xff] %v167
    %232 = vst [vmem:[#allocation8 + $0xc0] sm:$0xff] %v168
    %233 = vst [vmem:[#allocation8 + $0xc8] sm:$0xff] %v169
    %234 = vst [vmem:[#allocation8 + $0xd0] sm:$0xff] %v170
    %235 = vst [vmem:[#allocation8 + $0xd8] sm:$0xff] %v171
    %236 = vst [vmem:[#allocation8 + $0xe0] sm:$0xff] %v172
    %237 = vst [vmem:[#allocation8 + $0xe8] sm:$0xff] %v173
    %238 = vst [vmem:[#allocation8 + $0xf0] sm:$0xff] %v174
    %239 = vst [vmem:[#allocation8 + $0xf8] sm:$0xff] %v175
    %v240 = vadd.f32 %v144, %v152
    %v241 = vadd.f32 %v240, %v160
    %v242 = vadd.f32 %v241, %v168
    %v243 = vadd.f32 %v145, %v153
    %v244 = vadd.f32 %v243, %v161
    %v245 = vadd.f32 %v244, %v169
    %v246 = vadd.f32 %v146, %v154
    %v247 = vadd.f32 %v246, %v162
    %v248 = vadd.f32 %v247, %v170
    %v249 = vadd.f32 %v147, %v155
    %v250 = vadd.f32 %v249, %v163
    %v251 = vadd.f32 %v250, %v171
    %v252 = vadd.f32 %v148, %v156
    %v253 = vadd.f32 %v252, %v164
    %v254 = vadd.f32 %v253, %v172
    %v255 = vadd.f32 %v149, %v157
    %v256 = vadd.f32 %v255, %v165
    %v257 = vadd.f32 %v256, %v173
    %v258 = vadd.f32 %v150, %v158
    %v259 = vadd.f32 %v258, %v166
    %v260 = vadd.f32 %v259, %v174
    %v261 = vadd.f32 %v151, %v159
    %v262 = vadd.f32 %v261, %v167
    %v263 = vadd.f32 %v262, %v175
    %264 = vst [vmem:[#allocation10] sm:$0xff] %v242
    %265 = vst [vmem:[#allocation10 + $0x8] sm:$0xff] %v245
    %266 = vst [vmem:[#allocation10 + $0x10] sm:$0xff] %v248
    %267 = vst [vmem:[#allocation10 + $0x18] sm:$0xff] %v251
    %268 = vst [vmem:[#allocation10 + $0x20] sm:$0xff] %v254
    %269 = vst [vmem:[#allocation10 + $0x28] sm:$0xff] %v257
    %270 = vst [vmem:[#allocation10 + $0x30] sm:$0xff] %v260
    %271 = vst [vmem:[#allocation10 + $0x38] sm:$0xff] %v263
    // Predicated region
    $region18: #{tpu_custom_call.1} parent=1 // pred_check
      _
    $region19: #{tpu_custom_call.1} parent=1 // pred_check_branch
      %273 = sbr.rel (0) target = $region21
    $region20: #{tpu_custom_call.1} parent=1 // pred_region
      %275 = vsyncadd [#allocation4], 0
      %s276 = sshll.u32 [#allocation7], 4
      %s277 = int_to_ptr.vmem [resolvable:$true] %s276
      %s278 = sshll.u32 %s2, 4
      %s279 = int_to_ptr.hbm [resolvable:$true] %s278
      %284 = dma.vmem_to_hbm [thread:$0]  %s277, 4096, %s279, [#allocation4], 128, 128, 8
    $region21: #{tpu_custom_call.1} parent=1 // pred_fallthru
      _
    // Predicated region
    $region22: #{tpu_custom_call.1} parent=1 // pred_check
      _
    $region23: #{tpu_custom_call.1} parent=1 // pred_check_branch
      %286 = sbr.rel (0) target = $region25
    $region24: #{tpu_custom_call.1} parent=1 // pred_region
      %288 = vsyncadd [#allocation9], 0
      %s289 = sshll.u32 [#allocation8], 4
      %s290 = int_to_ptr.vmem [resolvable:$true] %s289
      %s291 = sshll.u32 %s3, 4
      %s292 = int_to_ptr.hbm [resolvable:$true] %s291
      %297 = dma.vmem_to_hbm [thread:$0]  %s290, 4096, %s292, [#allocation9], 128, 128, 8
    $region25: #{tpu_custom_call.1} parent=1 // pred_fallthru
      _
    // Predicated region
    $region26: #{tpu_custom_call.1} parent=1 // pred_check
      _
    $region27: #{tpu_custom_call.1} parent=1 // pred_check_branch
      %299 = sbr.rel (0) target = $region29
    $region28: #{tpu_custom_call.1} parent=1 // pred_region
      %301 = vsyncadd [#allocation9], 0
      %s302 = sshll.u32 [#allocation10], 4
      %s303 = int_to_ptr.vmem [resolvable:$true] %s302
      %s304 = sshll.u32 %s4, 4
      %s305 = int_to_ptr.hbm [resolvable:$true] %s304
      %310 = dma.vmem_to_hbm [thread:$0]  %s303, 1024, %s305, [#allocation9], 128, 128, 8
    $region29: #{tpu_custom_call.1} parent=1 // pred_fallthru
      _
    // Predicated region
    $region30: #{tpu_custom_call.1} parent=1 // pred_check
      _
    $region31: #{tpu_custom_call.1} parent=1 // pred_check_branch
      %312 = sbr.rel (0) target = $region33
    $region32: #{tpu_custom_call.1} parent=1 // pred_region
      %314 = dma.done [#allocation4], 4096
    $region33: #{tpu_custom_call.1} parent=1 // pred_fallthru
      _
    // Predicated region
    $region34: #{tpu_custom_call.1} parent=1 // pred_check
      _
    $region35: #{tpu_custom_call.1} parent=1 // pred_check_branch
      %316 = sbr.rel (0) target = $region37
    $region36: #{tpu_custom_call.1} parent=1 // pred_region
      %318 = dma.done [#allocation9], 4096
    $region37: #{tpu_custom_call.1} parent=1 // pred_fallthru
      _
    // Predicated region
    $region38: #{tpu_custom_call.1} parent=1 // pred_check
      _
    $region39: #{tpu_custom_call.1} parent=1 // pred_check_branch
      %320 = sbr.rel (0) target = $region41
    $region40: #{tpu_custom_call.1} parent=1 // pred_region
      %322 = dma.done [#allocation9], 1024
    $region41: #{tpu_custom_call.1} parent=1 // pred_fallthru
      _
    %323 = vsyncpa [#allocation3], 1
    %324 = vsyncpa [#allocation6], 1
    %325 = vsyncpa [#allocation4], 1
    %326 = vsyncpa [#allocation9], 1

</llo_original>
